<compile_context>
chip_gen: v7x
topology: tpu7x:2x2x1
jax: 0.10.0
libtpu: 0.0.40
codegen_flags: <defaults>
</compile_context>

<pallas_src>
import jax
import jax.numpy as jnp
from jax.experimental import pallas as pl
from jax.experimental.pallas import tpu as pltpu  # noqa: F401  (TPU backend)


def _hardsigmoid_mul_kernel(s_ref, x_ref, o_ref):
    # s_ref: (1, R) lane-major per-channel pre-activation (single small DMA)
    # x_ref / o_ref: (R, S) channel rows x spatial lanes
    s = s_ref[...].astype(jnp.float32)
    # Hardsigmoid: clip(x/6 + 1/2, 0, 1)  (== relu6(x + 3) / 6), in f32.
    hs = jnp.clip(s * (1.0 / 6.0) + 0.5, 0.0, 1.0)
    # One small XLU transpose moves the gate to the sublane axis; the multiply
    # then broadcasts across the spatial (lane) axis in-vreg.
    gate = hs.T  # (R, 1), float32
    o_ref[...] = (x_ref[...] * gate).astype(o_ref.dtype)


@jax.jit
def hardsigmoid_mul(x52, x48):
    """x52: (N, C, 1, 1), x48: (N, C, H, W) -> (N, C, H, W)."""
    N, C, H, W = x48.shape
    assert x52.shape == (N, C, 1, 1)

    s_row = x52.reshape(1, N * C)      # lane-major gate row (contiguous)
    x2d = x48.reshape(N * C, H * W)    # channel rows, spatial in lanes

    elems = N * C * H * W
    x_bytes = elems * x48.dtype.itemsize
    s_bytes = N * C * x52.dtype.itemsize

    out2d = pl.pallas_call(
        _hardsigmoid_mul_kernel,
        out_shape=jax.ShapeDtypeStruct((N * C, H * W), x48.dtype),
        # Whole (small) arrays as single VMEM blocks; block == full array dims,
        # so the (8, 128) divisibility rule does not apply. No grid: a grid
        # would only add per-step overhead for this HBM-latency-bound op.
        in_specs=[
            pl.BlockSpec((1, N * C), lambda: (0, 0)),
            pl.BlockSpec((N * C, H * W), lambda: (0, 0)),
        ],
        out_specs=pl.BlockSpec((N * C, H * W), lambda: (0, 0)),
        # Advisory hint: tiny, memory-bound custom call -> let XLA overlap it.
        cost_estimate=pl.CostEstimate(
            flops=2 * elems + 3 * N * C,
            transcendentals=0,
            bytes_accessed=2 * x_bytes + s_bytes,
        ),
        # NOTE: no input_output_aliases -- x48 is a live input; aliasing would
        # force a defensive copy (a full extra HBM read+write).
    )(s_row, x2d)

    return out2d.reshape(N, C, H, W)


if __name__ == "__main__":
    key = jax.random.PRNGKey(0)
    k1, k2 = jax.random.split(key)

    # Shapes matching the module's forward (already small).
    x48 = jax.random.normal(k1, (1, 120, 28, 28), dtype=jnp.float32)
    x52 = jax.random.normal(k2, (1, 120, 1, 1), dtype=jnp.float32)

    # Pure-JAX reference: Hardsigmoid(x52) * x48.
    ref = jnp.clip(x52 / 6.0 + 0.5, 0.0, 1.0) * x48
    ref = jax.block_until_ready(ref)

    out = hardsigmoid_mul(x52, x48)
    out = jax.block_until_ready(out)

    assert out.shape == (1, 120, 28, 28)
    assert jnp.allclose(out, ref, atol=1e-6), "mismatch vs reference"

    print("KERNEL_OK")
</pallas_src>

<mosaic_0001>
module attributes {stable_mosaic.version = 11 : i64} {
  func.func @_hardsigmoid_mul_kernel(%arg0: memref<1x120xf32, #tpu.memory_space<vmem>>, %arg1: memref<120x784xf32, #tpu.memory_space<vmem>>, %arg2: memref<120x784xf32, #tpu.memory_space<vmem>>) attributes {dimension_semantics = [], scalar_prefetch = 0 : i64, scratch_operands = 0 : i64, tpu.core_type = #tpu.core_type<tc>} {
    %c0 = arith.constant 0 : index
    %c0_0 = arith.constant 0 : index
    %0 = vector.load %arg0[%c0, %c0_0] : memref<1x120xf32, #tpu.memory_space<vmem>>, vector<1x120xf32>
    %cst = arith.constant 0.166666672 : f32
    %1 = vector.broadcast %cst : f32 to vector<1x120xf32>
    %2 = arith.mulf %0, %1 : vector<1x120xf32>
    %cst_1 = arith.constant 5.000000e-01 : f32
    %3 = vector.broadcast %cst_1 : f32 to vector<1x120xf32>
    %4 = arith.addf %2, %3 : vector<1x120xf32>
    %cst_2 = arith.constant 0.000000e+00 : f32
    %cst_3 = arith.constant 1.000000e+00 : f32
    %5 = vector.broadcast %cst_2 : f32 to vector<1x120xf32>
    %6 = arith.maximumf %5, %4 : vector<1x120xf32>
    %7 = vector.broadcast %cst_3 : f32 to vector<1x120xf32>
    %8 = arith.minimumf %7, %6 : vector<1x120xf32>
    %9 = tpu.transpose %8, [1, 0] : vector<1x120xf32> -> vector<120x1xf32>
    %c0_4 = arith.constant 0 : index
    %c0_5 = arith.constant 0 : index
    %10 = vector.load %arg1[%c0_4, %c0_5] : memref<120x784xf32, #tpu.memory_space<vmem>>, vector<120x784xf32>
    %11 = vector.broadcast %9 : vector<120x1xf32> to vector<120x784xf32>
    %12 = arith.mulf %10, %11 : vector<120x784xf32>
    %c0_6 = arith.constant 0 : index
    %c0_7 = arith.constant 0 : index
    %13 = vector.load %arg2[%c0_6, %c0_7] : memref<120x784xf32, #tpu.memory_space<vmem>>, vector<120x784xf32>
    tpu.vector_store %arg2[%c0_6, %c0_7], %12 {strides = array<i32>} : memref<120x784xf32, #tpu.memory_space<vmem>>, vector<120x784xf32>,
    return
  }
}

</mosaic_0001>

<llo_original>
// kernel: hardsigmoid_mul.1
$region0: #{hardsigmoid_mul.1}
  #allocation0 [shape = 'u32[]', space=smem, size = 0x4, offset = 0x4, fixed_abs, tag = 'smem constant byte address 0x4 - core index']
  #allocation1 [shape = 'u32[144,128]{1,0:T(1,128)}', space=vmem, size = 0x12000, scoped, tag = 'internal scratch']
  %s0 = inlined_call_operand.vmem [shape: f32[1,120], index: 0, kind: input, shape index: {}]
  %s1 = inlined_call_operand.vmem [shape: f32[120,784], index: 1, kind: input, shape index: {}]
  %s2 = inlined_call_operand.vmem [shape: f32[120,784], index: 2, kind: output, shape index: {}]
  %s3 = sld [smem:[#allocation0]]
  $region18: #{hardsigmoid_mul.1} parent=0
    _
  %s5 = ssub.s32 1, %s3
  %s6 = scalar_select 0, %s5, %s3
  // Predicated region
  $region2: #{hardsigmoid_mul.1} parent=0 // pred_check
    _
  $region3: #{hardsigmoid_mul.1} parent=0 // pred_check_branch
    %8 = sbr.rel (0) target = $region5
  $region4: #{hardsigmoid_mul.1} parent=0 // pred_region
    _
  $region5: #{hardsigmoid_mul.1} parent=0 // pred_fallthru
    _
  // Predicated region
  $region6: #{hardsigmoid_mul.1} parent=0 // pred_check
    _
  $region7: #{hardsigmoid_mul.1} parent=0 // pred_check_branch
    %10 = sbr.rel (0) target = $region9
  $region8: #{hardsigmoid_mul.1} parent=0 // pred_region
    _
  $region9: #{hardsigmoid_mul.1} parent=0 // pred_fallthru
    _
  %v11 = vld [vmem:[%s0] sm:$0x1]
  %v12 = vmul.f32 %v11, 0.16666667
  %v13 = vadd.f32 %v12, 0.5
  %v14 = vmax.f32 %v13, 0.0
  %v15 = vmin.f32 %v14, 1.0
  %16 = vxpose.xlu0.b32.start [1/16] %v15, 128
  %17 = vxpose.xlu0.b32.cont [2/16] 0.0, 128
  %18 = vxpose.xlu0.b32.cont [3/16] 0.0, 128
  %19 = vxpose.xlu0.b32.cont [4/16] 0.0, 128
  %20 = vxpose.xlu0.b32.cont [5/16] 0.0, 128
  %21 = vxpose.xlu0.b32.cont [6/16] 0.0, 128
  %22 = vxpose.xlu0.b32.cont [7/16] 0.0, 128
  %23 = vxpose.xlu0.b32.cont [8/16] 0.0, 128
  %24 = vxpose.xlu0.b32.cont [9/16] 0.0, 128
  %25 = vxpose.xlu0.b32.cont [10/16] 0.0, 128
  %26 = vxpose.xlu0.b32.cont [11/16] 0.0, 128
  %27 = vxpose.xlu0.b32.cont [12/16] 0.0, 128
  %28 = vxpose.xlu0.b32.cont [13/16] 0.0, 128
  %29 = vxpose.xlu0.b32.cont [14/16] 0.0, 128
  %30 = vxpose.xlu0.b32.cont [15/16] 0.0, 128
  %31 = vxpose.xlu0.b32.end [16/16] 0.0, 128
  %v32 = vpop.trf.xlu0
  %v33 = vpop.trf.xlu0
  %v34 = vpop.trf.xlu0
  %v35 = vpop.trf.xlu0
  %v36 = vpop.trf.xlu0
  %v37 = vpop.trf.xlu0
  %v38 = vpop.trf.xlu0
  %v39 = vpop.trf.xlu0
  %v40 = vpop.trf.xlu0
  %v41 = vpop.trf.xlu0
  %v42 = vpop.trf.xlu0
  %v43 = vpop.trf.xlu0
  %v44 = vpop.trf.xlu0
  %v45 = vpop.trf.xlu0
  %v46 = vpop.trf.xlu0
  %v47 = vpop.trf.xlu0
  %v48 = vld [vmem:[%s1] sm:$0xff]
  %v49 = vld [vmem:[%s1 + $0x8] sm:$0xff]
  %v50 = vld [vmem:[%s1 + $0x10] sm:$0xff]
  %v51 = vld [vmem:[%s1 + $0x18] sm:$0xff]
  %v52 = vld [vmem:[%s1 + $0x20] sm:$0xff]
  %v53 = vld [vmem:[%s1 + $0x28] sm:$0xff]
  %v54 = vld [vmem:[%s1 + $0x30] sm:$0xff]
  %v55 = vld [vmem:[%s1 + $0x38] sm:$0xff]
  %v56 = vld [vmem:[%s1 + $0x40] sm:$0xff]
  %v57 = vld [vmem:[%s1 + $0x48] sm:$0xff]
  %v58 = vld [vmem:[%s1 + $0x50] sm:$0xff]
  %v59 = vld [vmem:[%s1 + $0x58] sm:$0xff]
  %v60 = vld [vmem:[%s1 + $0x60] sm:$0xff]
  %v61 = vld [vmem:[%s1 + $0x68] sm:$0xff]
  %v62 = vld [vmem:[%s1 + $0x70] sm:$0xff]
  %v63 = vld [vmem:[%s1 + $0x78] sm:$0xff]
  %v64 = vld [vmem:[%s1 + $0x80] sm:$0xff]
  %v65 = vld [vmem:[%s1 + $0x88] sm:$0xff]
  %v66 = vld [vmem:[%s1 + $0x90] sm:$0xff]
  %v67 = vld [vmem:[%s1 + $0x98] sm:$0xff]
  %v68 = vld [vmem:[%s1 + $0xa0] sm:$0xff]
  %v69 = vld [vmem:[%s1 + $0xa8] sm:$0xff]
  %v70 = vld [vmem:[%s1 + $0xb0] sm:$0xff]
  %v71 = vld [vmem:[%s1 + $0xb8] sm:$0xff]
  %v72 = vld [vmem:[%s1 + $0xc0] sm:$0xff]
  %v73 = vld [vmem:[%s1 + $0xc8] sm:$0xff]
  %v74 = vld [vmem:[%s1 + $0xd0] sm:$0xff]
  %v75 = vld [vmem:[%s1 + $0xd8] sm:$0xff]
  %v76 = vld [vmem:[%s1 + $0xe0] sm:$0xff]
  %v77 = vld [vmem:[%s1 + $0xe8] sm:$0xff]
  %v78 = vld [vmem:[%s1 + $0xf0] sm:$0xff]
  %v79 = vld [vmem:[%s1 + $0xf8] sm:$0xff]
  %v80 = vld [vmem:[%s1 + $0x100] sm:$0xff]
  %v81 = vld [vmem:[%s1 + $0x108] sm:$0xff]
  %v82 = vld [vmem:[%s1 + $0x110] sm:$0xff]
  %v83 = vld [vmem:[%s1 + $0x118] sm:$0xff]
  %v84 = vld [vmem:[%s1 + $0x120] sm:$0xff]
  %v85 = vld [vmem:[%s1 + $0x128] sm:$0xff]
  %v86 = vld [vmem:[%s1 + $0x130] sm:$0xff]
  %v87 = vld [vmem:[%s1 + $0x138] sm:$0xff]
  %v88 = vld [vmem:[%s1 + $0x140] sm:$0xff]
  %v89 = vld [vmem:[%s1 + $0x148] sm:$0xff]
  %v90 = vld [vmem:[%s1 + $0x150] sm:$0xff]
  %v91 = vld [vmem:[%s1 + $0x158] sm:$0xff]
  %v92 = vld [vmem:[%s1 + $0x160] sm:$0xff]
  %v93 = vld [vmem:[%s1 + $0x168] sm:$0xff]
  %v94 = vld [vmem:[%s1 + $0x170] sm:$0xff]
  %v95 = vld [vmem:[%s1 + $0x178] sm:$0xff]
  %v96 = vld [vmem:[%s1 + $0x180] sm:$0xff]
  %v97 = vld [vmem:[%s1 + $0x188] sm:$0xff]
  %v98 = vld [vmem:[%s1 + $0x190] sm:$0xff]
  %v99 = vld [vmem:[%s1 + $0x198] sm:$0xff]
  %v100 = vld [vmem:[%s1 + $0x1a0] sm:$0xff]
  %v101 = vld [vmem:[%s1 + $0x1a8] sm:$0xff]
  %v102 = vld [vmem:[%s1 + $0x1b0] sm:$0xff]
  %v103 = vld [vmem:[%s1 + $0x1b8] sm:$0xff]
  %v104 = vld [vmem:[%s1 + $0x1c0] sm:$0xff]
  %v105 = vld [vmem:[%s1 + $0x1c8] sm:$0xff]
  %v106 = vld [vmem:[%s1 + $0x1d0] sm:$0xff]
  %v107 = vld [vmem:[%s1 + $0x1d8] sm:$0xff]
  %v108 = vld [vmem:[%s1 + $0x1e0] sm:$0xff]
  %v109 = vld [vmem:[%s1 + $0x1e8] sm:$0xff]
  %v110 = vld [vmem:[%s1 + $0x1f0] sm:$0xff]
  %v111 = vld [vmem:[%s1 + $0x1f8] sm:$0xff]
  %v112 = vld [vmem:[%s1 + $0x200] sm:$0xff]
  %v113 = vld [vmem:[%s1 + $0x208] sm:$0xff]
  %v114 = vld [vmem:[%s1 + $0x210] sm:$0xff]
  %v115 = vld [vmem:[%s1 + $0x218] sm:$0xff]
  %v116 = vld [vmem:[%s1 + $0x220] sm:$0xff]
  %v117 = vld [vmem:[%s1 + $0x228] sm:$0xff]
  %v118 = vld [vmem:[%s1 + $0x230] sm:$0xff]
  %v119 = vld [vmem:[%s1 + $0x238] sm:$0xff]
  %v120 = vld [vmem:[%s1 + $0x240] sm:$0xff]
  %v121 = vld [vmem:[%s1 + $0x248] sm:$0xff]
  %v122 = vld [vmem:[%s1 + $0x250] sm:$0xff]
  %v123 = vld [vmem:[%s1 + $0x258] sm:$0xff]
  %v124 = vld [vmem:[%s1 + $0x260] sm:$0xff]
  %v125 = vld [vmem:[%s1 + $0x268] sm:$0xff]
  %v126 = vld [vmem:[%s1 + $0x270] sm:$0xff]
  %v127 = vld [vmem:[%s1 + $0x278] sm:$0xff]
  %v128 = vld [vmem:[%s1 + $0x280] sm:$0xff]
  %v129 = vld [vmem:[%s1 + $0x288] sm:$0xff]
  %v130 = vld [vmem:[%s1 + $0x290] sm:$0xff]
  %v131 = vld [vmem:[%s1 + $0x298] sm:$0xff]
  %v132 = vld [vmem:[%s1 + $0x2a0] sm:$0xff]
  %v133 = vld [vmem:[%s1 + $0x2a8] sm:$0xff]
  %v134 = vld [vmem:[%s1 + $0x2b0] sm:$0xff]
  %v135 = vld [vmem:[%s1 + $0x2b8] sm:$0xff]
  %v136 = vld [vmem:[%s1 + $0x2c0] sm:$0xff]
  %v137 = vld [vmem:[%s1 + $0x2c8] sm:$0xff]
  %v138 = vld [vmem:[%s1 + $0x2d0] sm:$0xff]
  %v139 = vld [vmem:[%s1 + $0x2d8] sm:$0xff]
  %v140 = vld [vmem:[%s1 + $0x2e0] sm:$0xff]
  %v141 = vld [vmem:[%s1 + $0x2e8] sm:$0xff]
  %v142 = vld [vmem:[%s1 + $0x2f0] sm:$0xff]
  %v143 = vld [vmem:[%s1 + $0x2f8] sm:$0xff]
  %v144 = vld [vmem:[%s1 + $0x300] sm:$0xff]
  %v145 = vld [vmem:[%s1 + $0x308] sm:$0xff]
  %v146 = vld [vmem:[%s1 + $0x310] sm:$0xff]
  %v147 = vld [vmem:[%s1 + $0x318] sm:$0xff]
  %v148 = vld [vmem:[%s1 + $0x320] sm:$0xff]
  %v149 = vld [vmem:[%s1 + $0x328] sm:$0xff]
  %v150 = vld [vmem:[%s1 + $0x330] sm:$0xff]
  %v151 = vld [vmem:[%s1 + $0x338] sm:$0xff]
  %v152 = vld [vmem:[%s1 + $0x340] sm:$0xff]
  %154 = vset.pattern.permute.xlu0 0
  %155 = vperm.xlu0 %154, %v32
  %v156 = vpop.permute.xlu0 %155
  %159 = vset.pattern.permute.xlu0 0
  %160 = vperm.xlu0 %159, %v33
  %v161 = vpop.permute.xlu0 %160
  %164 = vset.pattern.permute.xlu0 0
  %165 = vperm.xlu0 %164, %v34
  %v166 = vpop.permute.xlu0 %165
  %169 = vset.pattern.permute.xlu0 0
  %170 = vperm.xlu0 %169, %v35
  %v171 = vpop.permute.xlu0 %170
  %174 = vset.pattern.permute.xlu0 0
  %175 = vperm.xlu0 %174, %v36
  %v176 = vpop.permute.xlu0 %175
  %179 = vset.pattern.permute.xlu0 0
  %180 = vperm.xlu0 %179, %v37
  %v181 = vpop.permute.xlu0 %180
  %184 = vset.pattern.permute.xlu0 0
  %185 = vperm.xlu0 %184, %v38
  %v186 = vpop.permute.xlu0 %185
  %189 = vset.pattern.permute.xlu0 0
  %190 = vperm.xlu0 %189, %v39
  %v191 = vpop.permute.xlu0 %190
  %194 = vset.pattern.permute.xlu0 0
  %195 = vperm.xlu0 %194, %v40
  %v196 = vpop.permute.xlu0 %195
  %199 = vset.pattern.permute.xlu0 0
  %200 = vperm.xlu0 %199, %v41
  %v201 = vpop.permute.xlu0 %200
  %204 = vset.pattern.permute.xlu0 0
  %205 = vperm.xlu0 %204, %v42
  %v206 = vpop.permute.xlu0 %205
  %209 = vset.pattern.permute.xlu0 0
  %210 = vperm.xlu0 %209, %v43
  %v211 = vpop.permute.xlu0 %210
  %214 = vset.pattern.permute.xlu0 0
  %215 = vperm.xlu0 %214, %v44
  %v216 = vpop.permute.xlu0 %215
  %219 = vset.pattern.permute.xlu0 0
  %220 = vperm.xlu0 %219, %v45
  %v221 = vpop.permute.xlu0 %220
  %224 = vset.pattern.permute.xlu0 0
  %225 = vperm.xlu0 %224, %v46
  %v226 = vpop.permute.xlu0 %225
  %v228 = vmul.f32 %v48, %v156
  %v229 = vmul.f32 %v49, %v156
  %v230 = vmul.f32 %v50, %v156
  %v231 = vmul.f32 %v51, %v156
  %v232 = vmul.f32 %v52, %v156
  %v233 = vmul.f32 %v53, %v156
  %v234 = vmul.f32 %v54, %v156
  %v235 = vmul.f32 %v55, %v161
  %v236 = vmul.f32 %v56, %v161
  %v237 = vmul.f32 %v57, %v161
  %v238 = vmul.f32 %v58, %v161
  %v239 = vmul.f32 %v59, %v161
  %v240 = vmul.f32 %v60, %v161
  %v241 = vmul.f32 %v61, %v161
  %v242 = vmul.f32 %v62, %v166
  %v243 = vmul.f32 %v63, %v166
  %v244 = vmul.f32 %v64, %v166
  %v245 = vmul.f32 %v65, %v166
  %v246 = vmul.f32 %v66, %v166
  %v247 = vmul.f32 %v67, %v166
  %v248 = vmul.f32 %v68, %v166
  %v249 = vmul.f32 %v69, %v171
  %v250 = vmul.f32 %v70, %v171
  %v251 = vmul.f32 %v71, %v171
  %v252 = vmul.f32 %v72, %v171
  %v253 = vmul.f32 %v73, %v171
  %v254 = vmul.f32 %v74, %v171
  %v255 = vmul.f32 %v75, %v171
  %v256 = vmul.f32 %v76, %v176
  %v257 = vmul.f32 %v77, %v176
  %v258 = vmul.f32 %v78, %v176
  %v259 = vmul.f32 %v79, %v176
  %v260 = vmul.f32 %v80, %v176
  %v261 = vmul.f32 %v81, %v176
  %v262 = vmul.f32 %v82, %v176
  %v263 = vmul.f32 %v83, %v181
  %v264 = vmul.f32 %v84, %v181
  %v265 = vmul.f32 %v85, %v181
  %v266 = vmul.f32 %v86, %v181
  %v267 = vmul.f32 %v87, %v181
  %v268 = vmul.f32 %v88, %v181
  %v269 = vmul.f32 %v89, %v181
  %v270 = vmul.f32 %v90, %v186
  %v271 = vmul.f32 %v91, %v186
  %v272 = vmul.f32 %v92, %v186
  %v273 = vmul.f32 %v93, %v186
  %v274 = vmul.f32 %v94, %v186
  %v275 = vmul.f32 %v95, %v186
  %v276 = vmul.f32 %v96, %v186
  %v277 = vmul.f32 %v97, %v191
  %v278 = vmul.f32 %v98, %v191
  %v279 = vmul.f32 %v99, %v191
  %v280 = vmul.f32 %v100, %v191
  %v281 = vmul.f32 %v101, %v191
  %v282 = vmul.f32 %v102, %v191
  %v283 = vmul.f32 %v103, %v191
  %v284 = vmul.f32 %v104, %v196
  %v285 = vmul.f32 %v105, %v196
  %v286 = vmul.f32 %v106, %v196
  %v287 = vmul.f32 %v107, %v196
  %v288 = vmul.f32 %v108, %v196
  %v289 = vmul.f32 %v109, %v196
  %v290 = vmul.f32 %v110, %v196
  %v291 = vmul.f32 %v111, %v201
  %v292 = vmul.f32 %v112, %v201
  %v293 = vmul.f32 %v113, %v201
  %v294 = vmul.f32 %v114, %v201
  %v295 = vmul.f32 %v115, %v201
  %v296 = vmul.f32 %v116, %v201
  %v297 = vmul.f32 %v117, %v201
  %v298 = vmul.f32 %v118, %v206
  %v299 = vmul.f32 %v119, %v206
  %v300 = vmul.f32 %v120, %v206
  %v301 = vmul.f32 %v121, %v206
  %v302 = vmul.f32 %v122, %v206
  %v303 = vmul.f32 %v123, %v206
  %v304 = vmul.f32 %v124, %v206
  %v305 = vmul.f32 %v125, %v211
  %v306 = vmul.f32 %v126, %v211
  %v307 = vmul.f32 %v127, %v211
  %v308 = vmul.f32 %v128, %v211
  %v309 = vmul.f32 %v129, %v211
  %v310 = vmul.f32 %v130, %v211
  %v311 = vmul.f32 %v131, %v211
  %v312 = vmul.f32 %v132, %v216
  %v313 = vmul.f32 %v133, %v216
  %v314 = vmul.f32 %v134, %v216
  %v315 = vmul.f32 %v135, %v216
  %v316 = vmul.f32 %v136, %v216
  %v317 = vmul.f32 %v137, %v216
  %v318 = vmul.f32 %v138, %v216
  %v319 = vmul.f32 %v139, %v221
  %v320 = vmul.f32 %v140, %v221
  %v321 = vmul.f32 %v141, %v221
  %v322 = vmul.f32 %v142, %v221
  %v323 = vmul.f32 %v143, %v221
  %v324 = vmul.f32 %v144, %v221
  %v325 = vmul.f32 %v145, %v221
  %v326 = vmul.f32 %v146, %v226
  %v327 = vmul.f32 %v147, %v226
  %v328 = vmul.f32 %v148, %v226
  %v329 = vmul.f32 %v149, %v226
  %v330 = vmul.f32 %v150, %v226
  %v331 = vmul.f32 %v151, %v226
  %v332 = vmul.f32 %v152, %v226
  %333 = vst [vmem:[%s2] sm:$0xff] %v228
  %334 = vst [vmem:[%s2 + $0x8] sm:$0xff] %v229
  %335 = vst [vmem:[%s2 + $0x10] sm:$0xff] %v230
  %336 = vst [vmem:[%s2 + $0x18] sm:$0xff] %v231
  %337 = vst [vmem:[%s2 + $0x20] sm:$0xff] %v232
  %338 = vst [vmem:[%s2 + $0x28] sm:$0xff] %v233
  %vm339 = vcmask 130048
  %340 = vst.msk [vmem:[%s2 + $0x30] sm:$0xff] %vm339, %v234
  %341 = vst [vmem:[%s2 + $0x38] sm:$0xff] %v235
  %342 = vst [vmem:[%s2 + $0x40] sm:$0xff] %v236
  %343 = vst [vmem:[%s2 + $0x48] sm:$0xff] %v237
  %344 = vst [vmem:[%s2 + $0x50] sm:$0xff] %v238
  %345 = vst [vmem:[%s2 + $0x58] sm:$0xff] %v239
  %346 = vst [vmem:[%s2 + $0x60] sm:$0xff] %v240
  %347 = vst.msk [vmem:[%s2 + $0x68] sm:$0xff] %vm339, %v241
  %348 = vst [vmem:[%s2 + $0x70] sm:$0xff] %v242
  %349 = vst [vmem:[%s2 + $0x78] sm:$0xff] %v243
  %350 = vst [vmem:[%s2 + $0x80] sm:$0xff] %v244
  %351 = vst [vmem:[%s2 + $0x88] sm:$0xff] %v245
  %352 = vst [vmem:[%s2 + $0x90] sm:$0xff] %v246
  %353 = vst [vmem:[%s2 + $0x98] sm:$0xff] %v247
  %354 = vst.msk [vmem:[%s2 + $0xa0] sm:$0xff] %vm339, %v248
  %355 = vst [vmem:[%s2 + $0xa8] sm:$0xff] %v249
  %356 = vst [vmem:[%s2 + $0xb0] sm:$0xff] %v250
  %357 = vst [vmem:[%s2 + $0xb8] sm:$0xff] %v251
  %358 = vst [vmem:[%s2 + $0xc0] sm:$0xff] %v252
  %359 = vst [vmem:[%s2 + $0xc8] sm:$0xff] %v253
  %360 = vst [vmem:[%s2 + $0xd0] sm:$0xff] %v254
  %361 = vst.msk [vmem:[%s2 + $0xd8] sm:$0xff] %vm339, %v255
  %362 = vst [vmem:[%s2 + $0xe0] sm:$0xff] %v256
  %363 = vst [vmem:[%s2 + $0xe8] sm:$0xff] %v257
  %364 = vst [vmem:[%s2 + $0xf0] sm:$0xff] %v258
  %365 = vst [vmem:[%s2 + $0xf8] sm:$0xff] %v259
  %366 = vst [vmem:[%s2 + $0x100] sm:$0xff] %v260
  %367 = vst [vmem:[%s2 + $0x108] sm:$0xff] %v261
  %368 = vst.msk [vmem:[%s2 + $0x110] sm:$0xff] %vm339, %v262
  %369 = vst [vmem:[%s2 + $0x118] sm:$0xff] %v263
  %370 = vst [vmem:[%s2 + $0x120] sm:$0xff] %v264
  %371 = vst [vmem:[%s2 + $0x128] sm:$0xff] %v265
  %372 = vst [vmem:[%s2 + $0x130] sm:$0xff] %v266
  %373 = vst [vmem:[%s2 + $0x138] sm:$0xff] %v267
  %374 = vst [vmem:[%s2 + $0x140] sm:$0xff] %v268
  %375 = vst.msk [vmem:[%s2 + $0x148] sm:$0xff] %vm339, %v269
  %376 = vst [vmem:[%s2 + $0x150] sm:$0xff] %v270
  %377 = vst [vmem:[%s2 + $0x158] sm:$0xff] %v271
  %378 = vst [vmem:[%s2 + $0x160] sm:$0xff] %v272
  %379 = vst [vmem:[%s2 + $0x168] sm:$0xff] %v273
  %380 = vst [vmem:[%s2 + $0x170] sm:$0xff] %v274
  %381 = vst [vmem:[%s2 + $0x178] sm:$0xff] %v275
  %382 = vst.msk [vmem:[%s2 + $0x180] sm:$0xff] %vm339, %v276
  %383 = vst [vmem:[%s2 + $0x188] sm:$0xff] %v277
  %384 = vst [vmem:[%s2 + $0x190] sm:$0xff] %v278
  %385 = vst [vmem:[%s2 + $0x198] sm:$0xff] %v279
  %386 = vst [vmem:[%s2 + $0x1a0] sm:$0xff] %v280
  %387 = vst [vmem:[%s2 + $0x1a8] sm:$0xff] %v281
  %388 = vst [vmem:[%s2 + $0x1b0] sm:$0xff] %v282
  %389 = vst.msk [vmem:[%s2 + $0x1b8] sm:$0xff] %vm339, %v283
  %390 = vst [vmem:[%s2 + $0x1c0] sm:$0xff] %v284
  %391 = vst [vmem:[%s2 + $0x1c8] sm:$0xff] %v285
  %392 = vst [vmem:[%s2 + $0x1d0] sm:$0xff] %v286
  %393 = vst [vmem:[%s2 + $0x1d8] sm:$0xff] %v287
  %394 = vst [vmem:[%s2 + $0x1e0] sm:$0xff] %v288
  %395 = vst [vmem:[%s2 + $0x1e8] sm:$0xff] %v289
  %396 = vst.msk [vmem:[%s2 + $0x1f0] sm:$0xff] %vm339, %v290
  %397 = vst [vmem:[%s2 + $0x1f8] sm:$0xff] %v291
  %398 = vst [vmem:[%s2 + $0x200] sm:$0xff] %v292
  %399 = vst [vmem:[%s2 + $0x208] sm:$0xff] %v293
  %400 = vst [vmem:[%s2 + $0x210] sm:$0xff] %v294
  %401 = vst [vmem:[%s2 + $0x218] sm:$0xff] %v295
  %402 = vst [vmem:[%s2 + $0x220] sm:$0xff] %v296
  %403 = vst.msk [vmem:[%s2 + $0x228] sm:$0xff] %vm339, %v297
  %404 = vst [vmem:[%s2 + $0x230] sm:$0xff] %v298
  %405 = vst [vmem:[%s2 + $0x238] sm:$0xff] %v299
  %406 = vst [vmem:[%s2 + $0x240] sm:$0xff] %v300
  %407 = vst [vmem:[%s2 + $0x248] sm:$0xff] %v301
  %408 = vst [vmem:[%s2 + $0x250] sm:$0xff] %v302
  %409 = vst [vmem:[%s2 + $0x258] sm:$0xff] %v303
  %410 = vst.msk [vmem:[%s2 + $0x260] sm:$0xff] %vm339, %v304
  %411 = vst [vmem:[%s2 + $0x268] sm:$0xff] %v305
  %412 = vst [vmem:[%s2 + $0x270] sm:$0xff] %v306
  %413 = vst [vmem:[%s2 + $0x278] sm:$0xff] %v307
  %414 = vst [vmem:[%s2 + $0x280] sm:$0xff] %v308
  %415 = vst [vmem:[%s2 + $0x288] sm:$0xff] %v309
  %416 = vst [vmem:[%s2 + $0x290] sm:$0xff] %v310
  %417 = vst.msk [vmem:[%s2 + $0x298] sm:$0xff] %vm339, %v311
  %418 = vst [vmem:[%s2 + $0x2a0] sm:$0xff] %v312
  %419 = vst [vmem:[%s2 + $0x2a8] sm:$0xff] %v313
  %420 = vst [vmem:[%s2 + $0x2b0] sm:$0xff] %v314
  %421 = vst [vmem:[%s2 + $0x2b8] sm:$0xff] %v315
  %422 = vst [vmem:[%s2 + $0x2c0] sm:$0xff] %v316
  %423 = vst [vmem:[%s2 + $0x2c8] sm:$0xff] %v317
  %424 = vst.msk [vmem:[%s2 + $0x2d0] sm:$0xff] %vm339, %v318
  %425 = vst [vmem:[%s2 + $0x2d8] sm:$0xff] %v319
  %426 = vst [vmem:[%s2 + $0x2e0] sm:$0xff] %v320
  %427 = vst [vmem:[%s2 + $0x2e8] sm:$0xff] %v321
  %428 = vst [vmem:[%s2 + $0x2f0] sm:$0xff] %v322
  %429 = vst [vmem:[%s2 + $0x2f8] sm:$0xff] %v323
  %430 = vst [vmem:[%s2 + $0x300] sm:$0xff] %v324
  %431 = vst.msk [vmem:[%s2 + $0x308] sm:$0xff] %vm339, %v325
  %432 = vst [vmem:[%s2 + $0x310] sm:$0xff] %v326
  %433 = vst [vmem:[%s2 + $0x318] sm:$0xff] %v327
  %434 = vst [vmem:[%s2 + $0x320] sm:$0xff] %v328
  %435 = vst [vmem:[%s2 + $0x328] sm:$0xff] %v329
  %436 = vst [vmem:[%s2 + $0x330] sm:$0xff] %v330
  %437 = vst [vmem:[%s2 + $0x338] sm:$0xff] %v331
  %438 = vst.msk [vmem:[%s2 + $0x340] sm:$0xff] %vm339, %v332
  // Predicated region
  $region10: #{hardsigmoid_mul.1} parent=0 // pred_check
    _
  $region11: #{hardsigmoid_mul.1} parent=0 // pred_check_branch
    %440 = sbr.rel (0) target = $region13
  $region12: #{hardsigmoid_mul.1} parent=0 // pred_region
    _
  $region13: #{hardsigmoid_mul.1} parent=0 // pred_fallthru
    _
  // Predicated region
  $region14: #{hardsigmoid_mul.1} parent=0 // pred_check
    _
  $region15: #{hardsigmoid_mul.1} parent=0 // pred_check_branch
    %442 = sbr.rel (0) target = $region17
  $region16: #{hardsigmoid_mul.1} parent=0 // pred_region
    _
  $region17: #{hardsigmoid_mul.1} parent=0 // pred_fallthru
    _

</llo_original>
